<compile_context>
chip_gen: v5e
topology: v5e:2x2
jax: 0.10.0
libtpu: 0.0.40
codegen_flags: <defaults>
</compile_context>

<pallas_src>
import jax
import jax.numpy as jnp
from jax.experimental import pallas as pl
from jax.experimental.pallas import tpu as pltpu


# ---------------------------------------------------------------------------
# Kernel
# ---------------------------------------------------------------------------
def _make_gcn_kernel(reorder_contraction):
    """Builds the kernel.

    Blocks: y (TB, N, Din) f32, adj (TB, TN, N) f32, x (TB, TN, H) f32,
            w (Din, H) bf16 (pre-transposed, resident), out (TB, TN, H).
    Non-reorder path additionally gets a (TB, N, H) bf16 support scratch.
    """
    eps = 1e-5

    def _layernorm(v):
        mu = jnp.mean(v, axis=-1, keepdims=True)
        var = jnp.mean(jnp.square(v - mu), axis=-1, keepdims=True)
        return (v - mu) * jax.lax.rsqrt(var + eps)

    if reorder_contraction:
        # (adj @ y) @ W  -- contracts the dominant NxN matmul over the narrower
        # feature width (fewer MXU column tiles than H).
        def kernel(y_ref, adj_ref, x_ref, w_ref, o_ref):
            adj = adj_ref[...].astype(jnp.bfloat16)        # cast in-kernel (free, DMA-bound)
            y = y_ref[...].astype(jnp.bfloat16)
            tmp = jnp.einsum('brn,bnd->brd', adj, y,
                             preferred_element_type=jnp.float32)     # (TB,TN,Din)
            out = jnp.einsum('brd,dh->brh', tmp.astype(jnp.bfloat16), w_ref[...],
                             preferred_element_type=jnp.float32)     # (TB,TN,H)
            x = x_ref[...].astype(jnp.float32)
            z = x + jnp.maximum(_layernorm(out), 0.0)                # LN -> ReLU -> +x
            o_ref[...] = _layernorm(z).astype(o_ref.dtype)
        return kernel

    # adj @ (y @ W)  -- support computed once per batch block into VMEM scratch
    # and reused across all adjacency row tiles (r axis is "arbitrary").
    def kernel(y_ref, adj_ref, x_ref, w_ref, o_ref, sup_ref):
        @pl.when(pl.program_id(1) == 0)
        def _():
            sup_ref[...] = jnp.einsum(
                'bnd,dh->bnh', y_ref[...].astype(jnp.bfloat16), w_ref[...],
                preferred_element_type=jnp.float32).astype(sup_ref.dtype)

        out = jnp.einsum('brn,bnh->brh',
                         adj_ref[...].astype(jnp.bfloat16), sup_ref[...],
                         preferred_element_type=jnp.float32)          # (TB,TN,H)
        x = x_ref[...].astype(jnp.float32)
        z = x + jnp.maximum(_layernorm(out), 0.0)                     # LN -> ReLU -> +x
        o_ref[...] = _layernorm(z).astype(o_ref.dtype)
    return kernel


# ---------------------------------------------------------------------------
# Generation-aware tuning
# ---------------------------------------------------------------------------
def _tpu_config():
    """Returns (block_budget_bytes, vmem_limit_bytes, mxu_width, multi_core)."""
    kind = ""
    try:
        kind = jax.devices()[0].device_kind.lower()
    except Exception:
        pass

    vmem_cap = None
    try:
        info = pltpu.get_tpu_info()
        vmem_cap = int(getattr(info, "vmem_capacity_bytes"))
    except Exception:
        vmem_cap = None
    if vmem_cap is None:
        vmem_cap = 64 * 1024 * 1024 if "v7" in kind else 128 * 1024 * 1024

    # MXU output-column width: 128 on v5e, 256 on v6e/v7x.
    is_v5e = ("v5 lite" in kind) or ("v5e" in kind) or ("v5lite" in kind)
    mxu_width = 128 if is_v5e else 256

    # Chips with >1 TensorCore per device (megacore) want >= 2 grid steps.
    multi_core = ("v7" in kind) or ("v4" in kind)

    if vmem_cap >= 100 * 1024 * 1024:
        # v5e / v6e: 128 MiB physical VMEM -> big tiles, large scoped request.
        block_budget = 48 * 1024 * 1024
        vmem_limit = 96 * 1024 * 1024
    else:
        # v7x: 64 MiB per TensorCore -> leave headroom for Mosaic internals.
        block_budget = 18 * 1024 * 1024
        vmem_limit = 52 * 1024 * 1024
    return block_budget, vmem_limit, mxu_width, multi_core


def _plan_tiles(B, N, D_in, H, block_budget, require_two_steps):
    """Pick (TB, TN, N_pad): batch block, adjacency row tile, padded node count."""

    def step_bytes(tb, tn, n_tot):
        # Double-buffered pipeline blocks (f32 streamed from HBM) + resident
        # weight + bf16 support scratch (not pipelined).
        adj_b = tb * tn * n_tot * 4
        y_b = tb * n_tot * D_in * 4
        x_b = tb * tn * H * 4
        o_b = tb * tn * H * 4
        w_b = D_in * H * 2
        sup_b = tb * n_tot * H * 2
        return 2 * (adj_b + y_b + x_b + o_b) + w_b + sup_b

    n_pad, tn = N, N
    if step_bytes(1, N, N) > block_budget:
        # Row-tile the adjacency; pad N up to a multiple of 128 so dense,
        # 128-aligned row tiles always exist (no `tn = N` overflow fallback).
        n_pad = ((N + 127) // 128) * 128
        tn = 128
        for cand in (4096, 2048, 1024, 512, 256, 128):
            if cand <= n_pad and n_pad % cand == 0 and \
                    step_bytes(1, cand, n_pad) <= block_budget:
                tn = cand
                break

    tb = 1
    for cand in range(B, 0, -1):
        if B % cand == 0 and step_bytes(cand, tn, n_pad) <= block_budget:
            tb = cand
            break

    if require_two_steps:
        # Megacore only: keep >= 2 grid steps so "parallel" axes can shard.
        while tb > 1 and (B // tb) * (n_pad // tn) < 2:
            tb -= 1
            while tb > 1 and B % tb != 0:
                tb -= 1
    return max(tb, 1), tn, n_pad


# ---------------------------------------------------------------------------
# Wrapper
# ---------------------------------------------------------------------------
def gcn_forward(x, y, adj, weight):
    """
    x      : (B, N, H)          residual input
    y      : (B, N, D_in)       GCN input
    adj    : (B, 1, N, N) or (B, N, N)   adjacency (single head)
    weight : (H, D_in)          GraphConvolution Linear weight (PyTorch layout)
    returns: (B, N, H) in x.dtype
    """
    B, N, H = x.shape
    D_in = y.shape[-1]

    if adj.ndim == 4:
        adj = adj.reshape(B, N, N)  # drop singleton head axis

    block_budget, vmem_limit, mxu_width, multi_core = _tpu_config()
    TB, TN, N_pad = _plan_tiles(B, N, D_in, H, block_budget, multi_core)

    if N_pad != N:
        pad_n = N_pad - N
        adj = jnp.pad(adj, ((0, 0), (0, pad_n), (0, pad_n)))
        y = jnp.pad(y, ((0, 0), (0, pad_n), (0, 0)))
        x = jnp.pad(x, ((0, 0), (0, pad_n), (0, 0)))

    # Tiny (H x D_in) parameter: pre-transpose + cast once (no per-step work).
    w_t = jnp.asarray(weight).T.astype(jnp.bfloat16)   # (D_in, H)

    # Reorder heuristic: compare MXU output-column tile counts; tie -> no reorder.
    reorder = (-(-D_in // mxu_width)) < (-(-H // mxu_width))

    kernel = _make_gcn_kernel(reorder)
    grid = (B // TB, N_pad // TN)

    if reorder:
        scratch_shapes = []
        dim_semantics = ("parallel", "parallel")
    else:
        scratch_shapes = [pltpu.VMEM((TB, N_pad, H), jnp.bfloat16)]
        dim_semantics = ("parallel", "arbitrary")   # scratch reused across r steps

    grid_spec = pltpu.PrefetchScalarGridSpec(
        num_scalar_prefetch=0,
        grid=grid,
        in_specs=[
            pl.BlockSpec((TB, N_pad, D_in), lambda b, r: (b, 0, 0)),  # y (const over r)
            pl.BlockSpec((TB, TN, N_pad), lambda b, r: (b, r, 0)),    # adj row tile
            pl.BlockSpec((TB, TN, H), lambda b, r: (b, r, 0)),        # x
            pl.BlockSpec((D_in, H), lambda b, r: (0, 0)),             # weight (resident)
        ],
        out_specs=pl.BlockSpec((TB, TN, H), lambda b, r: (b, r, 0)),
        scratch_shapes=scratch_shapes,
    )

    out = pl.pallas_call(
        kernel,
        out_shape=jax.ShapeDtypeStruct((B, N_pad, H), x.dtype),
        grid_spec=grid_spec,
        compiler_params=pltpu.CompilerParams(
            dimension_semantics=dim_semantics,
            vmem_limit_bytes=vmem_limit,
        ),
    )(y, adj, x, w_t)

    if N_pad != N:
        out = out[:, :N, :]
    return out


# ---------------------------------------------------------------------------
# Pure-JAX reference + demo
# ---------------------------------------------------------------------------
def _layernorm_ref(v, eps=1e-5):
    mu = jnp.mean(v, axis=-1, keepdims=True)
    var = jnp.mean(jnp.square(v - mu), axis=-1, keepdims=True)
    return (v - mu) * jax.lax.rsqrt(var + eps)


def gcn_reference(x, y, adj, weight):
    """Pure-JAX f32 reference matching the PyTorch module (inference mode)."""
    support = jnp.einsum('bnd,hd->bnh', y, weight)        # Linear (no bias)
    out = jnp.einsum('bij,bjh->bih', adj[:, 0], support)  # adj @ support (h = 1)
    y_gcn = jnp.maximum(_layernorm_ref(out), 0.0)         # LN -> ReLU (-> dropout id)
    return _layernorm_ref(x + y_gcn)                      # residual + LN


if __name__ == "__main__":
    # Small shapes consistent with the module's forward contract.
    B, N, D_in, H = 2, 16, 8, 32

    key = jax.random.PRNGKey(0)
    k_y, k_x, k_adj, k_w = jax.random.split(key, 4)

    y = jax.random.normal(k_y, (B, N, D_in), dtype=jnp.float32)
    x = jax.random.normal(k_x, (B, N, H), dtype=jnp.float32)

    # Simple deterministic adjacency (row-normalized random graph), head axis h=1.
    adj_raw = jax.random.uniform(k_adj, (B, N, N), dtype=jnp.float32)
    adj = (adj_raw / jnp.sum(adj_raw, axis=-1, keepdims=True))[:, None, :, :]

    # Deterministic Linear weight init (PyTorch default: U(-1/sqrt(in), 1/sqrt(in))).
    bound = 1.0 / (D_in ** 0.5)
    weight = jax.random.uniform(
        k_w, (H, D_in), dtype=jnp.float32, minval=-bound, maxval=bound
    )

    out = gcn_forward(x, y, adj, weight)
    jax.block_until_ready(out)

    ref = gcn_reference(x, y, adj, weight)
    jax.block_until_ready(ref)

    assert out.shape == (B, N, H)
    assert jnp.all(jnp.isfinite(out))
    max_err = float(jnp.max(jnp.abs(out - ref)))
    # Relaxed tolerance: MXU operands are cast to bf16 in-kernel (f32 accumulation).
    assert max_err < 5e-2, f"max abs error {max_err} vs f32 reference"
    print("KERNEL_OK")
</pallas_src>

<mosaic_0001>
module attributes {stable_mosaic.version = 11 : i64} {
  func.func @kernel(%arg0: i32, %arg1: i32, %arg2: memref<2x16x8xf32, #tpu.memory_space<vmem>>, %arg3: memref<2x16x16xf32, #tpu.memory_space<vmem>>, %arg4: memref<2x16x32xf32, #tpu.memory_space<vmem>>, %arg5: memref<8x32xbf16, #tpu.memory_space<vmem>>, %arg6: memref<2x16x32xf32, #tpu.memory_space<vmem>>, %arg7: memref<2x16x32xbf16, #tpu.memory_space<vmem>>) attributes {dimension_semantics = [#tpu.dimension_semantics<parallel>, #tpu.dimension_semantics<arbitrary>], iteration_bounds = array<i64: 1, 1>, scalar_prefetch = 0 : i64, scratch_operands = 1 : i64, tpu.core_type = #tpu.core_type<tc>, window_params = [{transform_indices = @transform_0, window_bounds = array<i64: 2, 16, 8>}, {transform_indices = @transform_1, window_bounds = array<i64: 2, 16, 16>}, {transform_indices = @transform_2, window_bounds = array<i64: 2, 16, 32>}, {pipeline_mode = #tpu.pipeline_mode<synchronous>, transform_indices = @transform_3, window_bounds = array<i64: 8, 32>}, {transform_indices = @transform_4, window_bounds = array<i64: 2, 16, 32>}]} {
    %c0_i32 = arith.constant 0 : i32
    %0 = arith.cmpi eq, %arg1, %c0_i32 : i32
    %1 = arith.extui %0 : i1 to i32
    %c0_i32_0 = arith.constant 0 : i32
    %2 = arith.cmpi ne, %1, %c0_i32_0 : i32
    scf.if %2 {
      %c0_23 = arith.constant 0 : index
      %c0_24 = arith.constant 0 : index
      %c0_25 = arith.constant 0 : index
      %48 = vector.load %arg2[%c0_23, %c0_24, %c0_25] : memref<2x16x8xf32, #tpu.memory_space<vmem>>, vector<2x16x8xf32>
      %49 = arith.truncf %48 : vector<2x16x8xf32> to vector<2x16x8xbf16>
      %c0_26 = arith.constant 0 : index
      %c0_27 = arith.constant 0 : index
      %50 = vector.load %arg5[%c0_26, %c0_27] : memref<8x32xbf16, #tpu.memory_space<vmem>>, vector<8x32xbf16>
      "tpu.trace_start"() <{level = 10 : i32, message = "bnd,dh->bnh"}> : () -> ()
      %cst_28 = arith.constant dense<0.000000e+00> : vector<2x16x32xf32>
      %51 = tpu.matmul %49, %50, %cst_28 {dimension_numbers = #tpu.dot_dimension_numbers<[2], [0], [0, 1], [1], [0, 0, 0, 1, 1, 1], [], []>} : vector<2x16x8xbf16>, vector<8x32xbf16>, vector<2x16x32xf32> -> vector<2x16x32xf32>
      "tpu.trace_stop"() : () -> ()
      %52 = arith.truncf %51 : vector<2x16x32xf32> to vector<2x16x32xbf16>
      %c0_29 = arith.constant 0 : index
      %c0_30 = arith.constant 0 : index
      %c0_31 = arith.constant 0 : index
      %53 = vector.load %arg7[%c0_29, %c0_30, %c0_31] : memref<2x16x32xbf16, #tpu.memory_space<vmem>>, vector<2x16x32xbf16>
      tpu.vector_store %arg7[%c0_29, %c0_30, %c0_31], %52 {strides = array<i32>} : memref<2x16x32xbf16, #tpu.memory_space<vmem>>, vector<2x16x32xbf16>,
    } else {
    }
    %c0 = arith.constant 0 : index
    %c0_1 = arith.constant 0 : index
    %c0_2 = arith.constant 0 : index
    %3 = vector.load %arg3[%c0, %c0_1, %c0_2] : memref<2x16x16xf32, #tpu.memory_space<vmem>>, vector<2x16x16xf32>
    %4 = arith.truncf %3 : vector<2x16x16xf32> to vector<2x16x16xbf16>
    %c0_3 = arith.constant 0 : index
    %c0_4 = arith.constant 0 : index
    %c0_5 = arith.constant 0 : index
    %5 = vector.load %arg7[%c0_3, %c0_4, %c0_5] : memref<2x16x32xbf16, #tpu.memory_space<vmem>>, vector<2x16x32xbf16>
    "tpu.trace_start"() <{level = 10 : i32, message = "brn,bnh->brh"}> : () -> ()
    %cst = arith.constant dense<0.000000e+00> : vector<2x16x32xf32>
    %6 = tpu.matmul %4, %5, %cst {dimension_numbers = #tpu.dot_dimension_numbers<[2], [1], [1], [2], [0, 0, 0, 1, 1, 2], [0], [0]>} : vector<2x16x16xbf16>, vector<2x16x32xbf16>, vector<2x16x32xf32> -> vector<2x16x32xf32>
    "tpu.trace_stop"() : () -> ()
    %c0_6 = arith.constant 0 : index
    %c0_7 = arith.constant 0 : index
    %c0_8 = arith.constant 0 : index
    %7 = vector.load %arg4[%c0_6, %c0_7, %c0_8] : memref<2x16x32xf32, #tpu.memory_space<vmem>>, vector<2x16x32xf32>
    %cst_9 = arith.constant dense<0.000000e+00> : vector<2x16xf32>
    %8 = vector.multi_reduction <add>, %6, %cst_9 [2] : vector<2x16x32xf32> to vector<2x16xf32>
    %9 = vector.shape_cast %8 : vector<2x16xf32> to vector<2x16x1xf32>
    %cst_10 = arith.constant 3.200000e+01 : f32
    %10 = vector.broadcast %cst_10 : f32 to vector<2x16x1xf32>
    %11 = arith.divf %9, %10 : vector<2x16x1xf32>
    %12 = vector.broadcast %11 : vector<2x16x1xf32> to vector<2x16x32xf32>
    %13 = arith.subf %6, %12 : vector<2x16x32xf32>
    %14 = arith.mulf %13, %13 : vector<2x16x32xf32>
    %cst_11 = arith.constant dense<0.000000e+00> : vector<2x16xf32>
    %15 = vector.multi_reduction <add>, %14, %cst_11 [2] : vector<2x16x32xf32> to vector<2x16xf32>
    %16 = vector.shape_cast %15 : vector<2x16xf32> to vector<2x16x1xf32>
    %cst_12 = arith.constant 3.200000e+01 : f32
    %17 = vector.broadcast %cst_12 : f32 to vector<2x16x1xf32>
    %18 = arith.divf %16, %17 : vector<2x16x1xf32>
    %19 = vector.broadcast %11 : vector<2x16x1xf32> to vector<2x16x32xf32>
    %20 = arith.subf %6, %19 : vector<2x16x32xf32>
    %cst_13 = arith.constant 9.99999974E-6 : f32
    %21 = vector.broadcast %cst_13 : f32 to vector<2x16x1xf32>
    %22 = arith.addf %18, %21 : vector<2x16x1xf32>
    %23 = math.rsqrt %22 : vector<2x16x1xf32>
    %24 = vector.broadcast %23 : vector<2x16x1xf32> to vector<2x16x32xf32>
    %25 = arith.mulf %20, %24 : vector<2x16x32xf32>
    %cst_14 = arith.constant 0.000000e+00 : f32
    %26 = vector.broadcast %cst_14 : f32 to vector<2x16x32xf32>
    %27 = arith.maximumf %25, %26 : vector<2x16x32xf32>
    %28 = arith.addf %7, %27 : vector<2x16x32xf32>
    %cst_15 = arith.constant dense<0.000000e+00> : vector<2x16xf32>
    %29 = vector.multi_reduction <add>, %28, %cst_15 [2] : vector<2x16x32xf32> to vector<2x16xf32>
    %30 = vector.shape_cast %29 : vector<2x16xf32> to vector<2x16x1xf32>
    %cst_16 = arith.constant 3.200000e+01 : f32
    %31 = vector.broadcast %cst_16 : f32 to vector<2x16x1xf32>
    %32 = arith.divf %30, %31 : vector<2x16x1xf32>
    %33 = vector.broadcast %32 : vector<2x16x1xf32> to vector<2x16x32xf32>
    %34 = arith.subf %28, %33 : vector<2x16x32xf32>
    %35 = arith.mulf %34, %34 : vector<2x16x32xf32>
    %cst_17 = arith.constant dense<0.000000e+00> : vector<2x16xf32>
    %36 = vector.multi_reduction <add>, %35, %cst_17 [2] : vector<2x16x32xf32> to vector<2x16xf32>
    %37 = vector.shape_cast %36 : vector<2x16xf32> to vector<2x16x1xf32>
    %cst_18 = arith.constant 3.200000e+01 : f32
    %38 = vector.broadcast %cst_18 : f32 to vector<2x16x1xf32>
    %39 = arith.divf %37, %38 : vector<2x16x1xf32>
    %40 = vector.broadcast %32 : vector<2x16x1xf32> to vector<2x16x32xf32>
    %41 = arith.subf %28, %40 : vector<2x16x32xf32>
    %cst_19 = arith.constant 9.99999974E-6 : f32
    %42 = vector.broadcast %cst_19 : f32 to vector<2x16x1xf32>
    %43 = arith.addf %39, %42 : vector<2x16x1xf32>
    %44 = math.rsqrt %43 : vector<2x16x1xf32>
    %45 = vector.broadcast %44 : vector<2x16x1xf32> to vector<2x16x32xf32>
    %46 = arith.mulf %41, %45 : vector<2x16x32xf32>
    %c0_20 = arith.constant 0 : index
    %c0_21 = arith.constant 0 : index
    %c0_22 = arith.constant 0 : index
    %47 = vector.load %arg6[%c0_20, %c0_21, %c0_22] : memref<2x16x32xf32, #tpu.memory_space<vmem>>, vector<2x16x32xf32>
    tpu.vector_store %arg6[%c0_20, %c0_21, %c0_22], %46 {strides = array<i32>} : memref<2x16x32xf32, #tpu.memory_space<vmem>>, vector<2x16x32xf32>,
    return
  }
  func.func @transform_0(%arg0: i32, %arg1: i32) -> (i32, i32, i32) {
    %c0_i32 = arith.constant 0 : i32
    %c0_i32_0 = arith.constant 0 : i32
    %c0_i32_1 = arith.constant 0 : i32
    return %arg0, %c0_i32, %c0_i32_0 : i32, i32, i32
  }
  func.func @transform_1(%arg0: i32, %arg1: i32) -> (i32, i32, i32) {
    %c0_i32 = arith.constant 0 : i32
    %c0_i32_0 = arith.constant 0 : i32
    return %arg0, %arg1, %c0_i32 : i32, i32, i32
  }
  func.func @transform_2(%arg0: i32, %arg1: i32) -> (i32, i32, i32) {
    %c0_i32 = arith.constant 0 : i32
    %c0_i32_0 = arith.constant 0 : i32
    return %arg0, %arg1, %c0_i32 : i32, i32, i32
  }
  func.func @transform_3(%arg0: i32, %arg1: i32) -> (i32, i32) {
    %c0_i32 = arith.constant 0 : i32
    %c0_i32_0 = arith.constant 0 : i32
    %c0_i32_1 = arith.constant 0 : i32
    return %c0_i32, %c0_i32_0 : i32, i32
  }
  func.func @transform_4(%arg0: i32, %arg1: i32) -> (i32, i32, i32) {
    %c0_i32 = arith.constant 0 : i32
    %c0_i32_0 = arith.constant 0 : i32
    return %arg0, %arg1, %c0_i32 : i32, i32, i32
  }
}

</mosaic_0001>

<llo_original>
// kernel: tpu_custom_call.1
$region0: #{tpu_custom_call.1}
  #allocation0 [shape = 'u32[]', space=smem, size = 0x4, offset = 0x4, fixed_abs, tag = 'smem constant byte address 0x4 - core index']
  #allocation1 [shape = 'u32[72,128]{1,0:T(1,128)}', space=vmem, size = 0x9000, scoped, tag = 'internal scratch']
  #allocation2 [shape = 'bf16[2,16,32]{2,1,0:T(8,128)(2,1)}', space=vmem, size = 0x2000, scoped, tag = 'scratch operand']
  %s0 = inlined_call_operand.vmem [shape: f32[2,16,8], index: 0, kind: input, shape index: {}]
  %s1 = inlined_call_operand.vmem [shape: f32[2,16,16], index: 1, kind: input, shape index: {}]
  %s2 = inlined_call_operand.hbm [shape: f32[2,16,32], index: 2, kind: input, shape index: {}]
  %s3 = inlined_call_operand.vmem [shape: bf16[8,32], index: 3, kind: input, shape index: {}]
  %s4 = inlined_call_operand.hbm [shape: f32[2,16,32], index: 4, kind: output, shape index: {}]
  %s5 = sld [smem:[#allocation0]]
  $region34: #{tpu_custom_call.1} parent=0
    _
  %s7 = ssub.s32 1, %s5
  %s8 = scalar_select 0, %s7, %s5
  $region1: #{tpu_custom_call.1} parent=0
    #allocation3 [shape = 'u8[16384]{0}', space=vmem, size = 0x4000, scoped, tag = 'input window, operand 2, single buffered']
    #allocation4 [shape = 's32[1]{0}', space=sflag, size = 0x4, scoped, tag = 'scoped memory for tpu_custom_call.1']
    #allocation5 [shape = 's32[1]{0}', space=sflag, size = 0x4, scoped, tag = 'scoped memory for tpu_custom_call.1']
    #allocation6 [shape = 'u8[16384]{0}', space=vmem, size = 0x4000, scoped, tag = 'output window, operand 0, single buffered']
    %9 = vsyncpa [#allocation4], 0
    %10 = vsyncpa [#allocation5], 0
    // Predicated region
    $region2: #{tpu_custom_call.1} parent=1 // pred_check
      _
    $region3: #{tpu_custom_call.1} parent=1 // pred_check_branch
      %12 = sbr.rel (0) target = $region5
    $region4: #{tpu_custom_call.1} parent=1 // pred_region
      _
    $region5: #{tpu_custom_call.1} parent=1 // pred_fallthru
      _
    // Predicated region
    $region6: #{tpu_custom_call.1} parent=1 // pred_check
      _
    $region7: #{tpu_custom_call.1} parent=1 // pred_check_branch
      %14 = sbr.rel (0) target = $region9
    $region8: #{tpu_custom_call.1} parent=1 // pred_region
      _
    $region9: #{tpu_custom_call.1} parent=1 // pred_fallthru
      _
    // Predicated region
    $region10: #{tpu_custom_call.1} parent=1 // pred_check
      _
    $region11: #{tpu_custom_call.1} parent=1 // pred_check_branch
      %16 = sbr.rel (0) target = $region13
    $region12: #{tpu_custom_call.1} parent=1 // pred_region
      %18 = vsyncadd [#allocation4], 0
      %s19 = sshll.u32 %s2, 4
      %s20 = int_to_ptr.hbm [resolvable:$true] %s19
      %s21 = sshll.u32 [#allocation3], 4
      %s22 = int_to_ptr.vmem [resolvable:$true] %s21
      %27 = dma.hbm_to_vmem [thread:$0]  %s20, 512, %s22, [#allocation4], 128, 128, 8
    $region13: #{tpu_custom_call.1} parent=1 // pred_fallthru
      _
    // Predicated region
    $region14: #{tpu_custom_call.1} parent=1 // pred_check
      _
    $region15: #{tpu_custom_call.1} parent=1 // pred_check_branch
      %29 = sbr.rel (0) target = $region17
    $region16: #{tpu_custom_call.1} parent=1 // pred_region
      _
    $region17: #{tpu_custom_call.1} parent=1 // pred_fallthru
      _
    // Predicated region
    $region18: #{tpu_custom_call.1} parent=1 // pred_check
      _
    $region19: #{tpu_custom_call.1} parent=1 // pred_check_branch
      %31 = sbr.rel (0) target = $region21
    $region20: #{tpu_custom_call.1} parent=1 // pred_region
      %33 = dma.done [#allocation4], 512
    $region21: #{tpu_custom_call.1} parent=1 // pred_fallthru
      _
    %p35 = scmp.eq.s32.totalorder 0, 0
    // Predicated region
    $region22: #{tpu_custom_call.1} parent=1 // pred_check
      %p36 = pneg %p35
    $region23: #{tpu_custom_call.1} parent=1 // pred_check_branch
      %38 = sbr.rel (%p36) target = $region25
    $region24: #{tpu_custom_call.1} parent=1 // pred_region
      %v39 = vld [vmem:[%s0] sm:$0xff]
      %v40 = vld [vmem:[%s0 + $0x8] sm:$0xff]
      %v41 = vld [vmem:[%s0 + $0x10] sm:$0xff]
      %v42 = vld [vmem:[%s0 + $0x18] sm:$0xff]
      %v43 = vpack.c.bf16 %v39, %v39
      %v44 = vpack.c.bf16 %v40, %v40
      %v45 = vpack.c.bf16 %v41, %v41
      %v46 = vpack.c.bf16 %v42, %v42
      %v47 = vld [vmem:[%s3] sm:$0xf]
      %v52 = vunpack.c.l.b16 %v43
      %v53 = vunpack.c.l.b16 %v44
      %v54 = vunpack.c.l.b16 %v45
      %v55 = vunpack.c.l.b16 %v46
      %v56 = vpack.c.b16 %v53, %v52
      %v57 = vpack.c.b16 %v55, %v54
      %vm58 = vcmask 64512
      %v60 = vsel %vm58, %v56, 0
      %v63 = vsel %vm58, %v57, 0
      %vm65 = vcmask 1043456
      %v67 = vsel %vm65, %v47, 0
      %69 = vmatpush.bf16.msra.mxu0 0
      %70 = vmatpush.bf16.msra.mxu0 0
      %71 = vmatpush.bf16.msra.mxu0 0
      %72 = vmatpush.bf16.msra.mxu0 0
      %73 = vmatpush.bf16.msra.mxu0 0
      %74 = vmatpush.bf16.msra.mxu0 0
      %75 = vmatpush.bf16.msra.mxu0 0
      %76 = vmatpush.bf16.msra.mxu0 %v67
      %77 = vmatmul.bf16.gmra.mxu0 %v60
      %v78 = vpop.f32.mrf.mxu0
      %v79 = vadd.f32 0.0, %v78
      %v80 = vpop.f32.mrf.mxu0
      %v81 = vadd.f32 0.0, %v80
      %82 = vmatmul.bf16.gmra.mxu0 %v63
      %v83 = vpop.f32.mrf.mxu0
      %v84 = vadd.f32 0.0, %v83
      %v85 = vpop.f32.mrf.mxu0
      %v86 = vadd.f32 0.0, %v85
      %87 = vdwg.mxu0
      %v88 = vpack.c.bf16 %v79, %v79
      %v89 = vpack.c.bf16 %v81, %v81
      %v90 = vpack.c.bf16 %v84, %v84
      %v91 = vpack.c.bf16 %v86, %v86
      %vm92 = vcmask 257024
      %93 = vst.msk [vmem:[#allocation2] sm:$0xf] %vm92, %v88
      %94 = vst.msk [vmem:[#allocation2 + $0x4] sm:$0xf] %vm92, %v89
      %95 = vst.msk [vmem:[#allocation2 + $0x8] sm:$0xf] %vm92, %v90
      %96 = vst.msk [vmem:[#allocation2 + $0xc] sm:$0xf] %vm92, %v91
    $region25: #{tpu_custom_call.1} parent=1 // pred_fallthru
      _
    %v97 = vld [vmem:[%s1] sm:$0xff]
    %v98 = vld [vmem:[%s1 + $0x8] sm:$0xff]
    %v99 = vld [vmem:[%s1 + $0x10] sm:$0xff]
    %v100 = vld [vmem:[%s1 + $0x18] sm:$0xff]
    %v101 = vpack.c.bf16 %v97, %v97
    %v102 = vpack.c.bf16 %v98, %v98
    %v103 = vpack.c.bf16 %v99, %v99
    %v104 = vpack.c.bf16 %v100, %v100
    %v105 = vld [vmem:[#allocation2] sm:$0xf]
    %v106 = vld [vmem:[#allocation2 + $0x4] sm:$0xf]
    %v107 = vld [vmem:[#allocation2 + $0x8] sm:$0xf]
    %v108 = vld [vmem:[#allocation2 + $0xc] sm:$0xf]
    %v111 = vunpack.c.l.b16 %v101
    %v112 = vunpack.c.l.b16 %v102
    %v113 = vpack.c.b16 %v112, %v111
    %v116 = vunpack.c.l.b16 %v105
    %v117 = vunpack.c.l.b16 %v106
    %v118 = vpack.c.b16 %v117, %v116
    %vm120 = vcmask 130048
    %v122 = vsel %vm120, %v113, 0
    %124 = vmatpush.bf16.msra.mxu0 0
    %125 = vmatpush.bf16.msra.mxu0 0
    %126 = vmatpush.bf16.msra.mxu0 0
    %127 = vmatpush.bf16.msra.mxu0 0
    %128 = vmatpush.bf16.msra.mxu0 0
    %129 = vmatpush.bf16.msra.mxu0 0
    %130 = vmatpush.bf16.msra.mxu0 0
    %131 = vmatpush.bf16.msra.mxu0 %v118
    %132 = vmatmul.bf16.gmra.mxu0 %v122
    %v133 = vpop.f32.mrf.mxu0
    %v134 = vadd.f32 0.0, %v133
    %v135 = vpop.f32.mrf.mxu0
    %v136 = vadd.f32 0.0, %v135
    %137 = vdwg.mxu0
    %v140 = vunpack.c.l.b16 %v103
    %v141 = vunpack.c.l.b16 %v104
    %v142 = vpack.c.b16 %v141, %v140
    %v145 = vunpack.c.l.b16 %v107
    %v146 = vunpack.c.l.b16 %v108
    %v147 = vpack.c.b16 %v146, %v145
    %v150 = vsel %vm120, %v142, 0
    %152 = vmatpush.bf16.msra.mxu0 0
    %153 = vmatpush.bf16.msra.mxu0 0
    %154 = vmatpush.bf16.msra.mxu0 0
    %155 = vmatpush.bf16.msra.mxu0 0
    %156 = vmatpush.bf16.msra.mxu0 0
    %157 = vmatpush.bf16.msra.mxu0 0
    %158 = vmatpush.bf16.msra.mxu0 0
    %159 = vmatpush.bf16.msra.mxu0 %v147
    %160 = vmatmul.bf16.gmra.mxu0 %v150
    %v161 = vpop.f32.mrf.mxu0
    %v162 = vadd.f32 0.0, %v161
    %v163 = vpop.f32.mrf.mxu0
    %v164 = vadd.f32 0.0, %v163
    %165 = vdwg.mxu0
    %v166 = vld [vmem:[#allocation3] sm:$0xff]
    %v167 = vld [vmem:[#allocation3 + $0x8] sm:$0xff]
    %v168 = vld [vmem:[#allocation3 + $0x10] sm:$0xff]
    %v169 = vld [vmem:[#allocation3 + $0x18] sm:$0xff]
    %vm170 = vcmask 261120
    %v171 = vsel %vm170, %v134, 0.0
    %172 = vadd.xlane.f32.xlu0 %v171
    %v173 = vpop.xlane.xlu0 %172
    %v174 = vsel %vm170, %v136, 0.0
    %175 = vadd.xlane.f32.xlu0 %v174
    %v176 = vpop.xlane.xlu0 %175
    %v177 = vsel %vm170, %v162, 0.0
    %178 = vadd.xlane.f32.xlu0 %v177
    %v179 = vpop.xlane.xlu0 %178
    %v180 = vsel %vm170, %v164, 0.0
    %181 = vadd.xlane.f32.xlu0 %v180
    %v182 = vpop.xlane.xlu0 %181
    %v183 = vrcp.pop 32.0
    %v184 = vmul.f32 32.0, %v183
    %v185 = vsub.f32 1.0, %v184
    %v186 = vmul.f32 %v183, %v185
    %v187 = vadd.f32 %v183, %v186
    %vm188 = vweird.f32 %v183
    %v189 = vsel %vm188, %v183, %v187
    %v190 = vmul.f32 %v173, %v189
    %v191 = vmul.f32 %v176, %v189
    %v192 = vmul.f32 %v179, %v189
    %v193 = vmul.f32 %v182, %v189
    %v194 = vsub.f32 %v134, %v190
    %v195 = vsub.f32 %v136, %v191
    %v196 = vsub.f32 %v162, %v192
    %v197 = vsub.f32 %v164, %v193
    %v198 = vmul.f32 %v194, %v194
    %v199 = vmul.f32 %v195, %v195
    %v200 = vmul.f32 %v196, %v196
    %v201 = vmul.f32 %v197, %v197
    %v202 = vsel %vm170, %v198, 0.0
    %203 = vadd.xlane.f32.xlu0 %v202
    %v204 = vpop.xlane.xlu0 %203
    %v205 = vsel %vm170, %v199, 0.0
    %206 = vadd.xlane.f32.xlu0 %v205
    %v207 = vpop.xlane.xlu0 %206
    %v208 = vsel %vm170, %v200, 0.0
    %209 = vadd.xlane.f32.xlu0 %v208
    %v210 = vpop.xlane.xlu0 %209
    %v211 = vsel %vm170, %v201, 0.0
    %212 = vadd.xlane.f32.xlu0 %v211
    %v213 = vpop.xlane.xlu0 %212
    %v214 = vmul.f32 %v204, %v189
    %v215 = vmul.f32 %v207, %v189
    %v216 = vmul.f32 %v210, %v189
    %v217 = vmul.f32 %v213, %v189
    %v218 = vadd.f32 %v214, 1e-05
    %v219 = vadd.f32 %v215, 1e-05
    %v220 = vadd.f32 %v216, 1e-05
    %v221 = vadd.f32 %v217, 1e-05
    %v222 = vrsqrt.pop %v218
    %v223 = vmul.f32 %v222, %v218
    %v224 = vmul.f32 %v223, %v222
    %v225 = vmul.f32 0.5, %v224
    %v226 = vsub.f32 1.5, %v225
    %v227 = vmul.f32 %v222, %v226
    %vm228 = vweird.f32 %v218
    %vm229 = vweird.f32 %v222
    %vm230 = vmor %vm228, %vm229
    %v231 = vsel %vm230, %v222, %v227
    %v232 = vrsqrt.pop %v219
    %v233 = vmul.f32 %v232, %v219
    %v234 = vmul.f32 %v233, %v232
    %v235 = vmul.f32 0.5, %v234
    %v236 = vsub.f32 1.5, %v235
    %v237 = vmul.f32 %v232, %v236
    %vm238 = vweird.f32 %v219
    %vm239 = vweird.f32 %v232
    %vm240 = vmor %vm238, %vm239
    %v241 = vsel %vm240, %v232, %v237
    %v242 = vrsqrt.pop %v220
    %v243 = vmul.f32 %v242, %v220
    %v244 = vmul.f32 %v243, %v242
    %v245 = vmul.f32 0.5, %v244
    %v246 = vsub.f32 1.5, %v245
    %v247 = vmul.f32 %v242, %v246
    %vm248 = vweird.f32 %v220
    %vm249 = vweird.f32 %v242
    %vm250 = vmor %vm248, %vm249
    %v251 = vsel %vm250, %v242, %v247
    %v252 = vrsqrt.pop %v221
    %v253 = vmul.f32 %v252, %v221
    %v254 = vmul.f32 %v253, %v252
    %v255 = vmul.f32 0.5, %v254
    %v256 = vsub.f32 1.5, %v255
    %v257 = vmul.f32 %v252, %v256
    %vm258 = vweird.f32 %v221
    %vm259 = vweird.f32 %v252
    %vm260 = vmor %vm258, %vm259
    %v261 = vsel %vm260, %v252, %v257
    %v262 = vmul.f32 %v194, %v231
    %v263 = vmul.f32 %v195, %v241
    %v264 = vmul.f32 %v196, %v251
    %v265 = vmul.f32 %v197, %v261
    %v266 = vmax.f32 %v262, 0.0
    %v267 = vmax.f32 %v263, 0.0
    %v268 = vmax.f32 %v264, 0.0
    %v269 = vmax.f32 %v265, 0.0
    %v270 = vadd.f32 %v166, %v266
    %v271 = vadd.f32 %v167, %v267
    %v272 = vadd.f32 %v168, %v268
    %v273 = vadd.f32 %v169, %v269
    %v274 = vsel %vm170, %v270, 0.0
    %275 = vadd.xlane.f32.xlu0 %v274
    %v276 = vpop.xlane.xlu0 %275
    %v277 = vsel %vm170, %v271, 0.0
    %278 = vadd.xlane.f32.xlu0 %v277
    %v279 = vpop.xlane.xlu0 %278
    %v280 = vsel %vm170, %v272, 0.0
    %281 = vadd.xlane.f32.xlu0 %v280
    %v282 = vpop.xlane.xlu0 %281
    %v283 = vsel %vm170, %v273, 0.0
    %284 = vadd.xlane.f32.xlu0 %v283
    %v285 = vpop.xlane.xlu0 %284
    %v286 = vmul.f32 %v276, %v189
    %v287 = vmul.f32 %v279, %v189
    %v288 = vmul.f32 %v282, %v189
    %v289 = vmul.f32 %v285, %v189
    %v290 = vsub.f32 %v270, %v286
    %v291 = vsub.f32 %v271, %v287
    %v292 = vsub.f32 %v272, %v288
    %v293 = vsub.f32 %v273, %v289
    %v294 = vmul.f32 %v290, %v290
    %v295 = vmul.f32 %v291, %v291
    %v296 = vmul.f32 %v292, %v292
    %v297 = vmul.f32 %v293, %v293
    %v298 = vsel %vm170, %v294, 0.0
    %299 = vadd.xlane.f32.xlu0 %v298
    %v300 = vpop.xlane.xlu0 %299
    %v301 = vsel %vm170, %v295, 0.0
    %302 = vadd.xlane.f32.xlu0 %v301
    %v303 = vpop.xlane.xlu0 %302
    %v304 = vsel %vm170, %v296, 0.0
    %305 = vadd.xlane.f32.xlu0 %v304
    %v306 = vpop.xlane.xlu0 %305
    %v307 = vsel %vm170, %v297, 0.0
    %308 = vadd.xlane.f32.xlu0 %v307
    %v309 = vpop.xlane.xlu0 %308
    %v310 = vmul.f32 %v300, %v189
    %v311 = vmul.f32 %v303, %v189
    %v312 = vmul.f32 %v306, %v189
    %v313 = vmul.f32 %v309, %v189
    %v314 = vadd.f32 %v310, 1e-05
    %v315 = vadd.f32 %v311, 1e-05
    %v316 = vadd.f32 %v312, 1e-05
    %v317 = vadd.f32 %v313, 1e-05
    %v318 = vrsqrt.pop %v314
    %v319 = vmul.f32 %v318, %v314
    %v320 = vmul.f32 %v319, %v318
    %v321 = vmul.f32 0.5, %v320
    %v322 = vsub.f32 1.5, %v321
    %v323 = vmul.f32 %v318, %v322
    %vm324 = vweird.f32 %v314
    %vm325 = vweird.f32 %v318
    %vm326 = vmor %vm324, %vm325
    %v327 = vsel %vm326, %v318, %v323
    %v328 = vrsqrt.pop %v315
    %v329 = vmul.f32 %v328, %v315
    %v330 = vmul.f32 %v329, %v328
    %v331 = vmul.f32 0.5, %v330
    %v332 = vsub.f32 1.5, %v331
    %v333 = vmul.f32 %v328, %v332
    %vm334 = vweird.f32 %v315
    %vm335 = vweird.f32 %v328
    %vm336 = vmor %vm334, %vm335
    %v337 = vsel %vm336, %v328, %v333
    %v338 = vrsqrt.pop %v316
    %v339 = vmul.f32 %v338, %v316
    %v340 = vmul.f32 %v339, %v338
    %v341 = vmul.f32 0.5, %v340
    %v342 = vsub.f32 1.5, %v341
    %v343 = vmul.f32 %v338, %v342
    %vm344 = vweird.f32 %v316
    %vm345 = vweird.f32 %v338
    %vm346 = vmor %vm344, %vm345
    %v347 = vsel %vm346, %v338, %v343
    %v348 = vrsqrt.pop %v317
    %v349 = vmul.f32 %v348, %v317
    %v350 = vmul.f32 %v349, %v348
    %v351 = vmul.f32 0.5, %v350
    %v352 = vsub.f32 1.5, %v351
    %v353 = vmul.f32 %v348, %v352
    %vm354 = vweird.f32 %v317
    %vm355 = vweird.f32 %v348
    %vm356 = vmor %vm354, %vm355
    %v357 = vsel %vm356, %v348, %v353
    %v358 = vmul.f32 %v290, %v327
    %v359 = vmul.f32 %v291, %v337
    %v360 = vmul.f32 %v292, %v347
    %v361 = vmul.f32 %v293, %v357
    %362 = vst.msk [vmem:[#allocation6] sm:$0xff] %vm170, %v358
    %363 = vst.msk [vmem:[#allocation6 + $0x8] sm:$0xff] %vm170, %v359
    %364 = vst.msk [vmem:[#allocation6 + $0x10] sm:$0xff] %vm170, %v360
    %365 = vst.msk [vmem:[#allocation6 + $0x18] sm:$0xff] %vm170, %v361
    // Predicated region
    $region26: #{tpu_custom_call.1} parent=1 // pred_check
      _
    $region27: #{tpu_custom_call.1} parent=1 // pred_check_branch
      %367 = sbr.rel (0) target = $region29
    $region28: #{tpu_custom_call.1} parent=1 // pred_region
      %369 = vsyncadd [#allocation5], 0
      %s370 = sshll.u32 [#allocation6], 4
      %s371 = int_to_ptr.vmem [resolvable:$true] %s370
      %s372 = sshll.u32 %s4, 4
      %s373 = int_to_ptr.hbm [resolvable:$true] %s372
      %378 = dma.vmem_to_hbm [thread:$0]  %s371, 512, %s373, [#allocation5], 128, 128, 8
    $region29: #{tpu_custom_call.1} parent=1 // pred_fallthru
      _
    // Predicated region
    $region30: #{tpu_custom_call.1} parent=1 // pred_check
      _
    $region31: #{tpu_custom_call.1} parent=1 // pred_check_branch
      %380 = sbr.rel (0) target = $region33
    $region32: #{tpu_custom_call.1} parent=1 // pred_region
      %382 = dma.done [#allocation5], 512
    $region33: #{tpu_custom_call.1} parent=1 // pred_fallthru
      _
    %383 = vsyncpa [#allocation4], 1
    %384 = vsyncpa [#allocation5], 1

</llo_original>
